<compile_context>
chip_gen: v5e
topology: v5e:2x2
jax: 0.10.0
libtpu: 0.0.40
codegen_flags: <defaults>
</compile_context>

<pallas_src>
import math

import jax
import jax.numpy as jnp
import numpy as np
from jax.experimental import pallas as pl
from jax.experimental.pallas import tpu as pltpu


def calculate_laplacian_with_self_loop(adj: jnp.ndarray) -> jnp.ndarray:
    """D^{-1/2} (A + I) D^{-1/2}, exactly as in the PyTorch helper."""
    n = adj.shape[0]
    mat = adj + jnp.eye(n, dtype=adj.dtype)
    row_sum = mat.sum(axis=1)
    d_inv_sqrt = jnp.power(row_sum, -0.5)
    d_inv_sqrt = jnp.where(jnp.isinf(d_inv_sqrt), 0.0, d_inv_sqrt)
    d_mat = jnp.diag(d_inv_sqrt)
    return (mat @ d_mat).T @ d_mat


def _gcn_kernel(lap_ref, x_ref, w_ref, out_ref):
    """One (row-tile, batch) grid step.

    lap_ref : (TN, N)  bf16  row stripe j of the normalized laplacian
    x_ref   : (I, N)   bf16  inputs for batch b in native layout (batch squeezed)
    w_ref   : (I, O)   f32   GCN weights
    out_ref : (TN, O)  f32   output rows for (b, row-tile j)
    """
    # ax[n, i] = sum_m L[n, m] * x[i, m]  -- "NT" matmul on the MXU, bf16
    # operands, f32 accumulation.  No reshape / relayout between the two dots.
    ax = jax.lax.dot_general(
        lap_ref[...], x_ref[...],
        dimension_numbers=(((1,), (1,)), ((), ())),
        preferred_element_type=jnp.float32,
    )  # (TN, I) f32
    # Tiny second matmul (K = input_dim) kept in f32: negligible FLOPs, and it
    # keeps extra rounding error out of the result.
    y = jnp.dot(ax, w_ref[...], preferred_element_type=jnp.float32)  # (TN, O)
    out_ref[...] = jnp.tanh(y)


def _choose_row_tile(num_nodes: int, input_dim: int, output_dim: int,
                     vmem_budget_bytes: int = 24 * 1024 * 1024,
                     tn_cap: int = 512) -> int:
    """Largest row tile (multiple of 8) whose double-buffered working set fits
    the budget.  Budget is conservative enough for v7x's 64 MiB VMEM."""
    # Per-step resident bytes (x2 for the pipeline's double buffering):
    #   L stripe : 2 * TN * num_nodes * 2   (bf16)
    #   x_b      : 2 * input_dim * num_nodes * 2   (bf16)
    #   out      : 2 * TN * output_dim * 4  (f32)
    #   W        : 2 * input_dim * output_dim * 4  (f32)
    fixed = 2 * input_dim * num_nodes * 2 + 2 * input_dim * output_dim * 4
    per_row = 2 * (num_nodes * 2 + output_dim * 4)
    tn = (vmem_budget_bytes - fixed) // per_row
    tn = int(min(tn, tn_cap))
    if tn >= num_nodes:
        return num_nodes                 # one stripe covers all rows
    return max(8, (tn // 8) * 8)         # sublane-aligned otherwise


def gcn_forward(x: jnp.ndarray, laplacian: jnp.ndarray,
                weights: jnp.ndarray) -> jnp.ndarray:
    """x: (B, I, N) f32, laplacian: (N, N) f32, weights: (I, O) f32
       -> (B, N, O) f32 (same as the PyTorch module)."""
    B, I, N = x.shape
    O = weights.shape[1]

    # bf16 operands for the dominant matmul: halves HBM traffic for L / x and
    # doubles MXU throughput; accumulation stays f32 inside the kernel.
    lap_bf = laplacian.astype(jnp.bfloat16)
    x_bf = x.astype(jnp.bfloat16)

    tn = _choose_row_tile(N, I, O)
    n_pad = pl.cdiv(N, tn) * tn
    if n_pad != N:
        # Pad node *rows* so the row tile divides evenly (zero rows, sliced
        # off below).  Columns (the contraction dim) stay at N.
        lap_bf = jnp.pad(lap_bf, ((0, n_pad - N), (0, 0)))

    grid = (n_pad // tn, B)  # batch is the fast axis -> L stripe reused across b

    out = pl.pallas_call(
        _gcn_kernel,
        out_shape=jax.ShapeDtypeStruct((B, n_pad, O), jnp.float32),
        grid_spec=pltpu.PrefetchScalarGridSpec(
            num_scalar_prefetch=0,
            grid=grid,
            in_specs=[
                # Row stripe of L; constant across the fast batch axis so the
                # pipeline keeps the buffer instead of re-fetching it.
                pl.BlockSpec((tn, N), lambda j, b: (j, 0)),
                # x for batch b, native (B, I, N) layout, batch dim squeezed.
                pl.BlockSpec((None, I, N), lambda j, b: (b, 0, 0)),
                pl.BlockSpec((I, O), lambda j, b: (0, 0)),
            ],
            # Output written directly in the PyTorch (B, N, O) layout: no
            # wrapper-side transpose passes over the activations.
            out_specs=pl.BlockSpec((None, tn, O), lambda j, b: (b, j, 0)),
        ),
        compiler_params=pltpu.CompilerParams(
            dimension_semantics=("parallel", "parallel"),
            vmem_limit_bytes=48 * 1024 * 1024,
        ),
    )(lap_bf, x_bf, weights)

    if n_pad != N:
        out = out[:, :N, :]
    return out


def gcn_forward_ref(x, laplacian, weights):
    """Pure-JAX f32 reference mirroring the PyTorch forward exactly."""
    B, I, N = x.shape
    O = weights.shape[1]
    xr = jnp.transpose(x, (2, 0, 1)).reshape(N, B * I)
    ax = laplacian @ xr
    ax = ax.reshape(N * B, I)
    y = jnp.tanh(ax @ weights)
    return jnp.transpose(y.reshape(N, B, O), (1, 0, 2))


if __name__ == "__main__":
    # Small shapes consistent with the module.
    batch = 2
    num_nodes = 16     # adj is (num_nodes, num_nodes)
    input_dim = 8      # e.g. sequence length in T-GCN
    output_dim = 32    # hidden dim

    key = jax.random.PRNGKey(0)
    k_adj, k_w, k_x = jax.random.split(key, 3)

    # Deterministic synthetic symmetric adjacency (0/1).
    a = (jax.random.uniform(k_adj, (num_nodes, num_nodes)) > 0.7).astype(jnp.float32)
    adj = jnp.maximum(a, a.T)
    laplacian = calculate_laplacian_with_self_loop(adj)

    # Xavier-uniform init with tanh gain (5/3), as in reset_parameters().
    gain = 5.0 / 3.0
    bound = gain * math.sqrt(6.0 / (input_dim + output_dim))
    weights = jax.random.uniform(
        k_w, (input_dim, output_dim), minval=-bound, maxval=bound, dtype=jnp.float32
    )

    # Inputs: (batch, input_dim, num_nodes), matching the module's forward.
    x = jax.random.normal(k_x, (batch, input_dim, num_nodes), dtype=jnp.float32)

    out = gcn_forward(x, laplacian, weights)
    out = jax.block_until_ready(out)

    ref = gcn_forward_ref(x, laplacian, weights)
    assert out.shape == (batch, num_nodes, output_dim)
    # bf16 operands on the dominant matmul -> tolerance loosened vs f32 ref.
    np.testing.assert_allclose(np.asarray(out), np.asarray(ref), rtol=2e-2, atol=2e-2)

    print("KERNEL_OK")
</pallas_src>

<mosaic_0001>
module attributes {stable_mosaic.version = 11 : i64} {
  func.func @_gcn_kernel(%arg0: i32, %arg1: i32, %arg2: memref<16x16xbf16, #tpu.memory_space<vmem>>, %arg3: memref<1x8x16xbf16, #tpu.memory_space<vmem>>, %arg4: memref<8x32xf32, #tpu.memory_space<vmem>>, %arg5: memref<1x16x32xf32, #tpu.memory_space<vmem>>) attributes {dimension_semantics = [#tpu.dimension_semantics<parallel>, #tpu.dimension_semantics<parallel>], iteration_bounds = array<i64: 1, 2>, scalar_prefetch = 0 : i64, scratch_operands = 0 : i64, tpu.core_type = #tpu.core_type<tc>, window_params = [{transform_indices = @transform_0, window_bounds = array<i64: 16, 16>}, {transform_indices = @transform_1, window_bounds = array<i64: 1, 8, 16>}, {pipeline_mode = #tpu.pipeline_mode<synchronous>, transform_indices = @transform_2, window_bounds = array<i64: 8, 32>}, {transform_indices = @transform_3, window_bounds = array<i64: 1, 16, 32>}]} {
    %c0 = arith.constant 0 : index
    %c0_0 = arith.constant 0 : index
    %0 = vector.load %arg2[%c0, %c0_0] : memref<16x16xbf16, #tpu.memory_space<vmem>>, vector<16x16xbf16>
    %c0_1 = arith.constant 0 : index
    %c0_2 = arith.constant 0 : index
    %c0_3 = arith.constant 0 : index
    %1 = vector.load %arg3[%c0_1, %c0_2, %c0_3] : memref<1x8x16xbf16, #tpu.memory_space<vmem>>, vector<1x8x16xbf16>
    %2 = vector.shape_cast %1 : vector<1x8x16xbf16> to vector<8x16xbf16>
    %cst = arith.constant dense<0.000000e+00> : vector<16x8xf32>
    %3 = tpu.matmul %0, %2, %cst {dimension_numbers = #tpu.dot_dimension_numbers<[1], [1], [0], [0], [0, 0, 1, 0], [], []>} : vector<16x16xbf16>, vector<8x16xbf16>, vector<16x8xf32> -> vector<16x8xf32>
    %c0_4 = arith.constant 0 : index
    %c0_5 = arith.constant 0 : index
    %4 = vector.load %arg4[%c0_4, %c0_5] : memref<8x32xf32, #tpu.memory_space<vmem>>, vector<8x32xf32>
    %cst_6 = arith.constant dense<0.000000e+00> : vector<16x32xf32>
    %5 = tpu.matmul %3, %4, %cst_6 {dimension_numbers = #tpu.dot_dimension_numbers<[1], [0], [0], [1], [0, 0, 1, 1], [], []>} : vector<16x8xf32>, vector<8x32xf32>, vector<16x32xf32> -> vector<16x32xf32>
    %6 = math.tanh %5 : vector<16x32xf32>
    %c0_7 = arith.constant 0 : index
    %c0_8 = arith.constant 0 : index
    %c0_9 = arith.constant 0 : index
    %7 = vector.load %arg5[%c0_7, %c0_8, %c0_9] : memref<1x16x32xf32, #tpu.memory_space<vmem>>, vector<1x16x32xf32>
    %8 = vector.shape_cast %7 : vector<1x16x32xf32> to vector<16x32xf32>
    %9 = vector.shape_cast %6 : vector<16x32xf32> to vector<1x16x32xf32>
    tpu.vector_store %arg5[%c0_7, %c0_8, %c0_9], %9 {strides = array<i32>} : memref<1x16x32xf32, #tpu.memory_space<vmem>>, vector<1x16x32xf32>,
    return
  }
  func.func @transform_0(%arg0: i32, %arg1: i32) -> (i32, i32) {
    %c0_i32 = arith.constant 0 : i32
    %c0_i32_0 = arith.constant 0 : i32
    return %arg0, %c0_i32 : i32, i32
  }
  func.func @transform_1(%arg0: i32, %arg1: i32) -> (i32, i32, i32) {
    %c0_i32 = arith.constant 0 : i32
    %c0_i32_0 = arith.constant 0 : i32
    %c0_i32_1 = arith.constant 0 : i32
    return %arg1, %c0_i32, %c0_i32_0 : i32, i32, i32
  }
  func.func @transform_2(%arg0: i32, %arg1: i32) -> (i32, i32) {
    %c0_i32 = arith.constant 0 : i32
    %c0_i32_0 = arith.constant 0 : i32
    %c0_i32_1 = arith.constant 0 : i32
    return %c0_i32, %c0_i32_0 : i32, i32
  }
  func.func @transform_3(%arg0: i32, %arg1: i32) -> (i32, i32, i32) {
    %c0_i32 = arith.constant 0 : i32
    %c0_i32_0 = arith.constant 0 : i32
    return %arg1, %arg0, %c0_i32 : i32, i32, i32
  }
}

</mosaic_0001>

<llo_original>
// kernel: tpu_custom_call.1
$region0: #{tpu_custom_call.1}
  #allocation0 [shape = 'u32[]', space=smem, size = 0x4, offset = 0x4, fixed_abs, tag = 'smem constant byte address 0x4 - core index']
  #allocation1 [shape = 'u32[72,128]{1,0:T(1,128)}', space=vmem, size = 0x9000, scoped, tag = 'internal scratch']
  %s0 = inlined_call_operand.hbm [shape: bf16[16,16], index: 0, kind: input, shape index: {}]
  %s1 = inlined_call_operand.hbm [shape: bf16[2,8,16], index: 1, kind: input, shape index: {}]
  %s2 = inlined_call_operand.hbm [shape: f32[8,32], index: 2, kind: input, shape index: {}]
  %s3 = inlined_call_operand.hbm [shape: f32[2,16,32], index: 3, kind: output, shape index: {}]
  %s4 = sld [smem:[#allocation0]]
  $region57: #{tpu_custom_call.1} parent=0
    _
  %s6 = ssub.s32 1, %s4
  %s7 = scalar_select 0, %s6, %s4
  $region1: #{tpu_custom_call.1} parent=0
    #allocation2 [shape = 'u8[4096]{0}', space=vmem, size = 0x1000, scoped, tag = 'input window, operand 0, single buffered']
    #allocation3 [shape = 's32[2]{0}', space=sflag, size = 0x8, scoped, tag = 'scoped memory for tpu_custom_call.1']
    #allocation4 [shape = 's32[2]{0}', space=sflag, size = 0x8, scoped, tag = 'scoped memory for tpu_custom_call.1']
    #allocation5 [shape = 'u8[4096]{0}', space=vmem, size = 0x1000, scoped, tag = 'input window, operand 1']
    #allocation6 [shape = 's32[2]{0}', space=sflag, size = 0x8, scoped, tag = 'scoped memory for tpu_custom_call.1']
    #allocation7 [shape = 'u8[4096]{0}', space=vmem, size = 0x1000, scoped, tag = 'input window, operand 2, single buffered']
    #allocation8 [shape = 'u8[16384]{0}', space=vmem, size = 0x4000, scoped, tag = 'output window, operand 0']
    %8 = vsyncpa [#allocation3], 0
    %9 = vsyncpa [#allocation6], 0
    %s10 = scalar_lea.sflag [#allocation6], 1
    %11 = vsyncpa %s10, 0
    %12 = vsyncpa [#allocation4], 0
    %s13 = scalar_lea.sflag [#allocation4], 1
    %14 = vsyncpa %s13, 0
    loop: start=0, step=1, limit=4
    $region2: #{tpu_custom_call.1} parent=1 // loop_pre_header
      _
    $region3: #{tpu_custom_call.1} parent=1 // loop_header
      %s16 = sphi 0, %s20
      %p17 = scmp.ge.s32.totalorder %s16, 4
      %s23 = sphi 0, %s35
      %s24 = sphi 0, %s31
      %s25 = sphi 0, %s23
      %s26 = sphi 0, %s24
      %s27 = sphi 0, %s25
      %s28 = sphi 0, %s26
      %s38 = sphi 0, %s40
      %s41 = sphi 0, %s38
      %s42 = sphi 0, %s41
      %s58 = sphi 0, %s42
      %s64 = sphi 0, %s66
      %s67 = sphi 0, %s64
      %s68 = sphi 0, %s67
      %s84 = sphi 0, %s68
      %s88 = sphi 0, %s88
      %s90 = sphi 0, %s88
      %s91 = sphi 0, %s90
      %s105 = sphi 0, %s91
      %s113 = sphi 0, %s115
      %s116 = sphi 0, %s113
      %s117 = sphi 0, %s116
      %s133 = sphi 0, %s117
    $region4: #{tpu_custom_call.1} parent=1 // loop_header_branch
      %19 = sbr.rel (%p17) target = $region8
    $region5: #{tpu_custom_call.1} parent=1 // loop_body
      %s21 = ssub.s32 %s16, 1
      %s22 = ssub.s32 %s16, 2
      %s29 = sadd.s32 1, %s24
      %p30 = scmp.ge.s32.totalorder %s29, 2
      %s31 = scalar_select %p30, 0, %s29
      %s32 = sadd.s32 1, %s23
      %s33 = scalar_select %p30, %s32, %s23
      %p34 = scmp.ge.s32.totalorder %s33, 1
      %s35 = scalar_select %p34, 0, %s33
      %s36 = ssub.s32 %s23, %s35
      %p37 = scmp.eq.s32.totalorder %s36, 0
      %s39 = sadd.s32 %s38, 1
      %s40 = scalar_select %p37, %s38, %s39
      %p43 = pneg %p37
      %p44 = scmp.eq.s32.totalorder %s16, 1
      %p45 = por %p43, %p44
      %p46 = scmp.ne.s32.totalorder %s38, %s41
      %p47 = scmp.eq.s32.totalorder %s16, 0
      %p48 = por %p46, %p47
      %p49 = scmp.ne.s32.totalorder %s38, %s41
      %p50 = scmp.eq.s32.totalorder %s21, 1
      %p51 = por %p49, %p50
      %p52 = scmp.ne.s32.totalorder %s41, %s42
      %p53 = scmp.eq.s32.totalorder %s21, 0
      %p54 = por %p52, %p53
      %p55 = scmp.ne.s32.totalorder %s41, %s42
      %p56 = scmp.eq.s32.totalorder %s22, 1
      %p57 = por %p55, %p56
      %p59 = scmp.ne.s32.totalorder %s42, %s58
      %p60 = scmp.eq.s32.totalorder %s22, 0
      %p61 = por %p59, %p60
      %s62 = ssub.s32 %s24, %s31
      %p63 = scmp.eq.s32.totalorder %s62, 0
      %s65 = sadd.s32 %s64, 1
      %s66 = scalar_select %p63, %s64, %s65
      %p69 = pneg %p63
      %p70 = scmp.eq.s32.totalorder %s16, 1
      %p71 = por %p69, %p70
      %p72 = scmp.ne.s32.totalorder %s64, %s67
      %p73 = scmp.eq.s32.totalorder %s16, 0
      %p74 = por %p72, %p73
      %p75 = scmp.ne.s32.totalorder %s64, %s67
      %p76 = scmp.eq.s32.totalorder %s21, 1
      %p77 = por %p75, %p76
      %p78 = scmp.ne.s32.totalorder %s67, %s68
      %p79 = scmp.eq.s32.totalorder %s21, 0
      %p80 = por %p78, %p79
      %p81 = scmp.ne.s32.totalorder %s67, %s68
      %p82 = scmp.eq.s32.totalorder %s22, 1
      %p83 = por %p81, %p82
      %p85 = scmp.ne.s32.totalorder %s68, %s84
      %p86 = scmp.eq.s32.totalorder %s22, 0
      %p87 = por %p85, %p86
      %s89 = sadd.s32 %s88, 1
      %p92 = scmp.eq.s32.totalorder %s16, 1
      %p93 = scmp.ne.s32.totalorder %s88, %s90
      %p94 = scmp.eq.s32.totalorder %s16, 0
      %p95 = por %p93, %p94
      %p96 = scmp.ne.s32.totalorder %s88, %s90
      %p97 = scmp.eq.s32.totalorder %s21, 1
      %p98 = por %p96, %p97
      %p99 = scmp.ne.s32.totalorder %s90, %s91
      %p100 = scmp.eq.s32.totalorder %s21, 0
      %p101 = por %p99, %p100
      %p102 = scmp.ne.s32.totalorder %s90, %s91
      %p103 = scmp.eq.s32.totalorder %s22, 1
      %p104 = por %p102, %p103
      %p106 = scmp.ne.s32.totalorder %s91, %s105
      %p107 = scmp.eq.s32.totalorder %s22, 0
      %p108 = por %p106, %p107
      %s109 = ssub.s32 %s24, %s31
      %s110 = ssub.s32 %s23, %s35
      %s111 = sor.u32 %s109, %s110
      %p112 = scmp.eq.s32.totalorder %s111, 0
      %s114 = sadd.s32 %s113, 1
      %s115 = scalar_select %p112, %s113, %s114
      %p118 = pneg %p112
      %p119 = scmp.eq.s32.totalorder %s16, 1
      %p120 = por %p118, %p119
      %p121 = scmp.ne.s32.totalorder %s113, %s116
      %p122 = scmp.eq.s32.totalorder %s16, 0
      %p123 = por %p121, %p122
      %p124 = scmp.ne.s32.totalorder %s113, %s116
      %p125 = scmp.eq.s32.totalorder %s21, 1
      %p126 = por %p124, %p125
      %p127 = scmp.ne.s32.totalorder %s116, %s117
      %p128 = scmp.eq.s32.totalorder %s21, 0
      %p129 = por %p127, %p128
      %p130 = scmp.ne.s32.totalorder %s116, %s117
      %p131 = scmp.eq.s32.totalorder %s22, 1
      %p132 = por %p130, %p131
      %p134 = scmp.ne.s32.totalorder %s117, %s133
      %p135 = scmp.eq.s32.totalorder %s22, 0
      %p136 = por %p134, %p135
      %p137 = scmp.le.s32.totalorder 1, %s16
      %p138 = scmp.lt.s32.totalorder %s16, 3
      %p139 = pnand %p137, %p138
      %p140 = pneg %p139
      // Predicated region
      $region9: #{tpu_custom_call.1} parent=5 // pred_check
        _
      $region10: #{tpu_custom_call.1} parent=5 // pred_check_branch
        %142 = sbr.rel (%p139) target = $region12
      $region11: #{tpu_custom_call.1} parent=5 // pred_region
        %s143 = ssub.s32 %s16, 1
        // Predicated region
        $region13: #{tpu_custom_call.1} parent=11 // pred_check
          %p144 = pneg %p54
        $region14: #{tpu_custom_call.1} parent=11 // pred_check_branch
          %146 = sbr.rel (%p144) target = $region16
        $region15: #{tpu_custom_call.1} parent=11 // pred_region
          %s147 = smul.u32 2, %s25
          %149 = vsyncadd [#allocation3], 0
          %s150 = smul.addr %s147, 4
          %s151 = scalar_lea.hbm %s0, %s150
          %s152 = sshll.u32 %s151, 4
          %s153 = int_to_ptr.hbm [resolvable:$true] %s152
          %s154 = sshll.u32 [#allocation2], 4
          %s155 = int_to_ptr.vmem [resolvable:$true] %s154
          %160 = dma.hbm_to_vmem [thread:$0]  %s153, 128, %s155, [#allocation3], 64, 64, 4
        $region16: #{tpu_custom_call.1} parent=11 // pred_fallthru
          _
        // Predicated region
        $region17: #{tpu_custom_call.1} parent=11 // pred_check
          %p161 = pneg %p101
        $region18: #{tpu_custom_call.1} parent=11 // pred_check_branch
          %163 = sbr.rel (%p161) target = $region20
        $region19: #{tpu_custom_call.1} parent=11 // pred_region
          %165 = vsyncadd [#allocation6], 0
          %s167 = sshll.u32 %s2, 4
          %s168 = int_to_ptr.hbm [resolvable:$true] %s167
          %s169 = sshll.u32 [#allocation7], 4
          %s170 = int_to_ptr.vmem [resolvable:$true] %s169
          %172 = dma.hbm_to_vmem [thread:$0]  %s168, 128, %s170, [#allocation6]
        $region20: #{tpu_custom_call.1} parent=11 // pred_fallthru
          _
      $region12: #{tpu_custom_call.1} parent=5 // pred_fallthru
        _
      %p173 = scmp.lt.s32.totalorder %s16, 2
      // Predicated region
      $region21: #{tpu_custom_call.1} parent=5 // pred_check
        %p174 = pneg %p173
      $region22: #{tpu_custom_call.1} parent=5 // pred_check_branch
        %176 = sbr.rel (%p174) target = $region24
      $region23: #{tpu_custom_call.1} parent=5 // pred_region
        // Predicated region
        $region25: #{tpu_custom_call.1} parent=23 // pred_check
          %p177 = pneg %p74
        $region26: #{tpu_custom_call.1} parent=23 // pred_check_branch
          %179 = sbr.rel (%p177) target = $region28
        $region27: #{tpu_custom_call.1} parent=23 // pred_region
          %s180 = sand.u32 %s16, 1
          %s181 = scalar_lea.sflag [#allocation6], %s180
          %s182 = sand.u32 %s64, 1
          %s183 = smul.addr %s182, 4
          %s184 = scalar_lea.vmem [#allocation5], %s183
          %186 = vsyncadd %s181, 0
          %s187 = smul.addr %s24, 4
          %s188 = scalar_lea.hbm %s1, %s187
          %s190 = sshll.u32 %s188, 4
          %s191 = int_to_ptr.hbm [resolvable:$true] %s190
          %s192 = sshll.u32 %s184, 4
          %s193 = int_to_ptr.vmem [resolvable:$true] %s192
          %195 = dma.hbm_to_vmem [thread:$0]  %s191, 64, %s193, %s181
        $region28: #{tpu_custom_call.1} parent=23 // pred_fallthru
          _
      $region24: #{tpu_custom_call.1} parent=5 // pred_fallthru
        _
      %p196 = scmp.le.s32.totalorder 1, %s16
      %p197 = scmp.lt.s32.totalorder %s16, 3
      %p198 = pnand %p196, %p197
      %p199 = pneg %p198
      // Predicated region
      $region29: #{tpu_custom_call.1} parent=5 // pred_check
        _
      $region30: #{tpu_custom_call.1} parent=5 // pred_check_branch
        %201 = sbr.rel (%p198) target = $region32
      $region31: #{tpu_custom_call.1} parent=5 // pred_region
        %s202 = ssub.s32 %s16, 1
        // Predicated region
        $region33: #{tpu_custom_call.1} parent=31 // pred_check
          %p203 = pneg %p54
        $region34: #{tpu_custom_call.1} parent=31 // pred_check_branch
          %205 = sbr.rel (%p203) target = $region36
        $region35: #{tpu_custom_call.1} parent=31 // pred_region
          %207 = dma.done [#allocation3], 128
        $region36: #{tpu_custom_call.1} parent=31 // pred_fallthru
          _
        %s208 = sand.u32 %s21, 1
        %s209 = scalar_lea.sflag [#allocation6], %s208
        %s210 = sand.u32 %s67, 1
        %s211 = smul.addr %s210, 4
        %s212 = scalar_lea.vmem [#allocation5], %s211
        // Predicated region
        $region37: #{tpu_custom_call.1} parent=31 // pred_check
          %p213 = pneg %p80
        $region38: #{tpu_custom_call.1} parent=31 // pred_check_branch
          %215 = sbr.rel (%p213) target = $region40
        $region39: #{tpu_custom_call.1} parent=31 // pred_region
          %217 = dma.done %s209, 64
        $region40: #{tpu_custom_call.1} parent=31 // pred_fallthru
          _
        // Predicated region
        $region41: #{tpu_custom_call.1} parent=31 // pred_check
          %p218 = pneg %p101
        $region42: #{tpu_custom_call.1} parent=31 // pred_check_branch
          %220 = sbr.rel (%p218) target = $region44
        $region43: #{tpu_custom_call.1} parent=31 // pred_region
          %222 = dma.done [#allocation6], 128
        $region44: #{tpu_custom_call.1} parent=31 // pred_fallthru
          _
        %p223 = pneg %p54
        %p224 = pneg %p51
        %s225 = sand.u32 %s21, 1
        %s226 = scalar_lea.sflag [#allocation6], %s225
        %s227 = sand.u32 %s67, 1
        %s228 = smul.addr %s227, 4
        %s229 = scalar_lea.vmem [#allocation5], %s228
        %p230 = pneg %p80
        %p231 = pneg %p77
        %p232 = pneg %p101
        %p233 = pneg %p98
        %p234 = pneg %p129
        %p235 = pneg %p126
        %s236 = sand.u32 %s116, 1
        %s237 = scalar_lea.sflag [#allocation4], %s236
        %s238 = sand.u32 %s116, 1
        %s239 = smul.addr %s238, 16
        %s240 = scalar_lea.vmem [#allocation8], %s239
        %s241 = smul.u32 2, %s25
        %s242 = smul.u32 2, %s25
        %v244 = vld [vmem:[#allocation2] sm:$0xf]
        %v245 = vld [vmem:[#allocation2 + $0x4] sm:$0xf]
        %v246 = vld [vmem:[%s212] sm:$0xf]
        %v249 = vunpack.c.l.b16 %v244
        %v250 = vunpack.c.l.b16 %v245
        %v251 = vpack.c.b16 %v250, %v249
        %vm252 = vcmask 130048
        %v254 = vsel %vm252, %v251, 0
        %v257 = vsel %vm252, %v246, 0
        %259 = vmatpush.bf16.xpose.msra.mxu0 0
        %260 = vmatpush.bf16.xpose.msra.mxu0 0
        %261 = vmatpush.bf16.xpose.msra.mxu0 0
        %262 = vmatpush.bf16.xpose.msra.mxu0 0
        %263 = vmatpush.bf16.xpose.msra.mxu0 0
        %264 = vmatpush.bf16.xpose.msra.mxu0 0
        %265 = vmatpush.bf16.xpose.msra.mxu0 0
        %266 = vmatpush.bf16.xpose.msra.mxu0 %v257
        %267 = vmatmul.bf16.gmra.mxu0 %v254
        %v268 = vpop.f32.mrf.mxu0
        %v269 = vadd.f32 0.0, %v268
        %v270 = vpop.f32.mrf.mxu0
        %v271 = vadd.f32 0.0, %v270
        %272 = vdwg.mxu0
        %v273 = vld [vmem:[#allocation7] sm:$0xff]
        %vm274 = vcmask 64512
        %v276 = vsel %vm274, %v269, 0
        %v279 = vsel %vm274, %v271, 0
        %281 = vmatpush.msra.mxu0 0.0
        %282 = vmatpush.msra.mxu0 0.0
        %283 = vmatpush.msra.mxu0 0.0
        %284 = vmatpush.msra.mxu0 0.0
        %285 = vmatpush.msra.mxu0 0.0
        %286 = vmatpush.msra.mxu0 0.0
        %287 = vmatpush.msra.mxu0 0.0
        %288 = vmatpush.msra.mxu0 0.0
        %289 = vmatpush.msra.mxu0 0.0
        %290 = vmatpush.msra.mxu0 0.0
        %291 = vmatpush.msra.mxu0 0.0
        %292 = vmatpush.msra.mxu0 0.0
        %293 = vmatpush.msra.mxu0 0.0
        %294 = vmatpush.msra.mxu0 0.0
        %295 = vmatpush.msra.mxu0 0.0
        %296 = vmatpush.msra.mxu0 %v273
        %297 = vmatmul.f32.gmra.mxu0 %v276
        %v298 = vpop.f32.mrf.mxu0
        %v299 = vadd.f32 0.0, %v298
        %300 = vmatmul.f32.gmra.mxu0 %v279
        %v301 = vpop.f32.mrf.mxu0
        %v302 = vadd.f32 0.0, %v301
        %303 = vdwg.mxu0
        %v304 = vtanh.pop %v299
        %v305 = vtanh.pop %v302
        %vm306 = vcmask 261120
        %307 = vst.msk [vmem:[%s240] sm:$0xff] %vm306, %v304
        %308 = vst.msk [vmem:[%s240 + $0x8] sm:$0xff] %vm306, %v305
        %s309 = sand.u32 %s116, 1
        %s310 = scalar_lea.sflag [#allocation4], %s309
        %s311 = sand.u32 %s116, 1
        %s312 = smul.addr %s311, 16
        %s313 = scalar_lea.vmem [#allocation8], %s312
        // Predicated region
        $region45: #{tpu_custom_call.1} parent=31 // pred_check
          %p314 = pneg %p126
        $region46: #{tpu_custom_call.1} parent=31 // pred_check_branch
          %316 = sbr.rel (%p314) target = $region48
        $region47: #{tpu_custom_call.1} parent=31 // pred_region
          %s317 = smul.u32 2, %s25
          %319 = vsyncadd %s310, 0
          %s320 = smul.addr %s26, 2
          %s321 = sadd.s32 %s317, %s320
          %s322 = smul.addr %s321, 8
          %s323 = scalar_lea.hbm %s3, %s322
          %s324 = sshll.u32 %s313, 4
          %s325 = int_to_ptr.vmem [resolvable:$true] %s324
          %s326 = sshll.u32 %s323, 4
          %s327 = int_to_ptr.hbm [resolvable:$true] %s326
          %332 = dma.vmem_to_hbm [thread:$0]  %s325, 256, %s327, %s310, 128, 128, 8
        $region48: #{tpu_custom_call.1} parent=31 // pred_fallthru
          _
      $region32: #{tpu_custom_call.1} parent=5 // pred_fallthru
        _
      %p333 = scmp.le.s32.totalorder 2, %s16
      // Predicated region
      $region49: #{tpu_custom_call.1} parent=5 // pred_check
        %p334 = pneg %p333
      $region50: #{tpu_custom_call.1} parent=5 // pred_check_branch
        %336 = sbr.rel (%p334) target = $region52
      $region51: #{tpu_custom_call.1} parent=5 // pred_region
        %s337 = ssub.s32 %s16, 2
        // Predicated region
        $region53: #{tpu_custom_call.1} parent=51 // pred_check
          %p338 = pneg %p132
        $region54: #{tpu_custom_call.1} parent=51 // pred_check_branch
          %340 = sbr.rel (%p338) target = $region56
        $region55: #{tpu_custom_call.1} parent=51 // pred_region
          %s341 = sand.u32 %s117, 1
          %s342 = scalar_lea.sflag [#allocation4], %s341
          %s343 = sand.u32 %s117, 1
          %s344 = smul.addr %s343, 16
          %s345 = scalar_lea.vmem [#allocation8], %s344
          %347 = dma.done %s342, 256
        $region56: #{tpu_custom_call.1} parent=51 // pred_fallthru
          _
      $region52: #{tpu_custom_call.1} parent=5 // pred_fallthru
        _
    $region6: #{tpu_custom_call.1} parent=1 // loop_footer
      %s20 = sadd.s32 1, %s16
    $region7: #{tpu_custom_call.1} parent=1 // loop_footer_branch
      %15 = sbr.rel target = $region3
    $region8: #{tpu_custom_call.1} parent=1 // loop_exit
      _
    %348 = vsyncpa [#allocation3], 1
    %s349 = scalar_lea.sflag [#allocation3], 1
    %350 = vsyncpa %s349, 1
    %351 = vsyncpa [#allocation6], 1
    %s352 = scalar_lea.sflag [#allocation6], 1
    %353 = vsyncpa %s352, 1
    %354 = vsyncpa [#allocation4], 1
    %s355 = scalar_lea.sflag [#allocation4], 1
    %356 = vsyncpa %s355, 1

</llo_original>
